<compile_context>
chip_gen: v5e
topology: v5e:2x2
jax: 0.10.0
libtpu: 0.0.40
codegen_flags: <defaults>
</compile_context>

<pallas_src>
import jax
import jax.numpy as jnp
from jax.experimental import pallas as pl
from jax.experimental.pallas import tpu as pltpu


def _round_up(x, m):
    return ((x + m - 1) // m) * m


# ---------------------------------------------------------------------------
# Kernels
# ---------------------------------------------------------------------------

def _linear_full_k_kernel(x_ref, w_ref, b_ref, o_ref):
    """Single MXU pass over the full K extent: y = x @ w + b (w is (K, N))."""
    o_ref[...] = (
        jnp.dot(x_ref[...], w_ref[...], preferred_element_type=jnp.float32)
        + b_ref[...]
    ).astype(o_ref.dtype)


def _linear_kgrid_kernel(x_ref, w_ref, b_ref, o_ref):
    """Grid (i, j, k): accumulate straight into the resident f32 output tile."""
    k = pl.program_id(2)
    part = jnp.dot(x_ref[...], w_ref[...], preferred_element_type=jnp.float32)

    @pl.when(k == 0)
    def _():
        o_ref[...] = part + b_ref[...]        # bias added exactly once

    @pl.when(k != 0)
    def _():
        o_ref[...] += part


# ---------------------------------------------------------------------------
# Wrapper
# ---------------------------------------------------------------------------

# Conservative tile VMEM budget that fits every generation's scoped VMEM once
# vmem_limit_bytes is raised (v7x: 64 MiB physical; v5e default scope 16 MiB).
_VMEM_TILE_BUDGET = 28 * 1024 * 1024
# Below this many padded f32 elements, use the grid-less single-tile fast path.
_SMALL_ELEMS = 128 * 1024


def prepare_linear_params(w, b, *, mxu_dtype=jnp.bfloat16):
    """One-time parameter prep (do at load time, not per forward call).

    w: (output_size, input_size) -- PyTorch nn.Linear layout.
    Returns w_t: (input_size, output_size) cast to mxu_dtype (or unchanged if
    mxu_dtype is None) and b: (output_size,) float32.
    """
    w_t = jnp.asarray(w).T
    if mxu_dtype is not None:
        w_t = w_t.astype(mxu_dtype)
    return w_t, jnp.asarray(b, dtype=jnp.float32)


def _tile_vmem_bytes(tb, tn, tk, in_bytes):
    x_b = tb * tk * in_bytes * 2          # double-buffered
    w_b = tk * tn * in_bytes * 2
    b_b = tn * 4 * 2
    o_b = tb * tn * 4 * 2                 # f32 output tile
    return x_b + w_b + b_b + o_b


def linear_forward(x, w_t, b, *, tb=None, tn=None, tk=None,
                   mxu_dtype=jnp.bfloat16):
    """y = x @ w_t + b, with w_t = weight.T (K, N). Matches nn.Linear.forward.

    x:   (B, input_size)
    w_t: (input_size, output_size)   -- from prepare_linear_params
    b:   (output_size,)
    mxu_dtype: dtype fed to the MXU (bf16 recommended); accumulation is f32.
    """
    B, K = x.shape
    K2, N = w_t.shape
    assert K == K2 and b.shape == (N,)

    in_dtype = jnp.dtype(mxu_dtype) if mxu_dtype is not None else jnp.dtype(x.dtype)
    in_bytes = in_dtype.itemsize

    # ---- tiny-problem fast path: one grid-less kernel invocation -----------
    Bp8, Kp128, Np128 = _round_up(B, 8), _round_up(K, 128), _round_up(N, 128)
    footprint = Bp8 * Kp128 + Kp128 * Np128 + Bp8 * Np128
    if tb is None and tn is None and tk is None and footprint <= _SMALL_ELEMS:
        xp = jnp.pad(x, ((0, Bp8 - B), (0, Kp128 - K))).astype(in_dtype)
        wp = jnp.pad(w_t, ((0, Kp128 - K), (0, Np128 - N))).astype(in_dtype)
        bp = jnp.pad(b, (0, Np128 - N)).astype(jnp.float32).reshape(1, Np128)
        out = pl.pallas_call(
            _linear_full_k_kernel,
            out_shape=jax.ShapeDtypeStruct((Bp8, Np128), jnp.float32),
            in_specs=[pl.BlockSpec(memory_space=pltpu.MemorySpace.VMEM)] * 3,
            out_specs=pl.BlockSpec(memory_space=pltpu.MemorySpace.VMEM),
        )(xp, wp, bp)
        return out[:B, :N]

    # ---- tile selection (MXU / lane aligned, VMEM budgeted) -----------------
    if tb is None:
        tb = min(512, _round_up(B, 8))
    assert tb % 8 == 0, "batch tile must be a multiple of 8 (f32 sublane)"
    if tn is None:
        tn = min(1024, _round_up(N, 128))
    assert tn % 128 == 0, "output tile must be lane-dense (multiple of 128)"
    if tk is None:
        # Prefer the full K in one tile (drops the reduction grid axis).
        tk = _round_up(K, 128)
        while (_tile_vmem_bytes(tb, tn, tk, in_bytes) > _VMEM_TILE_BUDGET
               and tk > 512):
            tk = max(512, _round_up(tk // 2, 128))
    assert tk % 128 == 0, "reduction tile must be a multiple of 128"
    # If still over budget, shrink the non-reduction tiles.
    while _tile_vmem_bytes(tb, tn, tk, in_bytes) > _VMEM_TILE_BUDGET and tn > 128:
        tn = max(128, _round_up(tn // 2, 128))
    while _tile_vmem_bytes(tb, tn, tk, in_bytes) > _VMEM_TILE_BUDGET and tb > 8:
        tb = max(8, _round_up(tb // 2, 8))

    Bp = _round_up(B, tb)
    Np = _round_up(N, tn)
    Kp = _round_up(K, tk)

    # v7x shards parallel grid axes across its 2 TensorCores: make sure the
    # parallel grid has >= 2 blocks when the problem allows it.
    if (Bp // tb) * (Np // tn) == 1:
        if Np >= 256:
            tn = _round_up(Np // 2, 128)
            Np = _round_up(N, tn)
        elif Bp >= 16:
            tb = _round_up(Bp // 2, 8)
            Bp = _round_up(B, tb)

    grid_i, grid_j, grid_k = Bp // tb, Np // tn, Kp // tk

    # ---- zero-pad + cast operands (glue work in plain JAX) ------------------
    xp = x
    if Bp != B or Kp != K:
        xp = jnp.pad(xp, ((0, Bp - B), (0, Kp - K)))
    xp = xp.astype(in_dtype)
    wp = w_t
    if Kp != K or Np != N:
        wp = jnp.pad(wp, ((0, Kp - K), (0, Np - N)))
    wp = wp.astype(in_dtype)
    bp = b if Np == N else jnp.pad(b, (0, Np - N))
    bp = bp.astype(jnp.float32).reshape(1, Np)

    vmem_bytes = _tile_vmem_bytes(tb, tn, tk, in_bytes)
    vmem_limit = min(max(int(vmem_bytes * 1.5), 32 * 1024 * 1024),
                     48 * 1024 * 1024)

    cost = pl.CostEstimate(
        flops=2 * Bp * Np * Kp,
        # W is streamed once per batch block, x once per N block (re-streaming),
        # output written once.
        bytes_accessed=(in_bytes * (Bp * Kp * grid_j + Kp * Np * grid_i)
                        + 4 * (Bp * Np + Np)),
        transcendentals=0,
    )

    if grid_k == 1:
        # Full K per tile: pure data-parallel grid, no reduction axis at all.
        out = pl.pallas_call(
            _linear_full_k_kernel,
            out_shape=jax.ShapeDtypeStruct((Bp, Np), jnp.float32),
            grid_spec=pltpu.PrefetchScalarGridSpec(
                num_scalar_prefetch=0,
                grid=(grid_i, grid_j),
                in_specs=[
                    pl.BlockSpec((tb, Kp), lambda i, j: (i, 0)),   # x tile
                    pl.BlockSpec((Kp, tn), lambda i, j: (0, j)),   # w tile (K,N)
                    pl.BlockSpec((1, tn), lambda i, j: (0, j)),    # bias tile
                ],
                out_specs=pl.BlockSpec((tb, tn), lambda i, j: (i, j)),
            ),
            compiler_params=pltpu.CompilerParams(
                dimension_semantics=("parallel", "parallel"),
                vmem_limit_bytes=vmem_limit,
            ),
            cost_estimate=cost,
        )(xp, wp, bp)
    else:
        out = pl.pallas_call(
            _linear_kgrid_kernel,
            out_shape=jax.ShapeDtypeStruct((Bp, Np), jnp.float32),
            grid_spec=pltpu.PrefetchScalarGridSpec(
                num_scalar_prefetch=0,
                grid=(grid_i, grid_j, grid_k),
                in_specs=[
                    pl.BlockSpec((tb, tk), lambda i, j, k: (i, k)),   # x tile
                    pl.BlockSpec((tk, tn), lambda i, j, k: (k, j)),   # w tile
                    pl.BlockSpec((1, tn), lambda i, j, k: (0, j)),    # bias tile
                ],
                out_specs=pl.BlockSpec((tb, tn), lambda i, j, k: (i, j)),
            ),
            compiler_params=pltpu.CompilerParams(
                dimension_semantics=("parallel", "parallel", "arbitrary"),
                vmem_limit_bytes=vmem_limit,
            ),
            cost_estimate=cost,
        )(xp, wp, bp)

    if Bp != B or Np != N:
        out = out[:B, :N]
    return out


if __name__ == "__main__":
    key = jax.random.PRNGKey(0)

    # ---- case 1: tiny shapes from LinearModel(input_size, output_size, ...) ---
    B, IN, OUT = 8, 32, 16
    k1, k2, k3, key = jax.random.split(key, 4)
    bound = 1.0 / (IN ** 0.5)
    w = jax.random.uniform(k2, (OUT, IN), minval=-bound, maxval=bound,
                           dtype=jnp.float32)           # PyTorch (out, in) layout
    bias = jax.random.uniform(k3, (OUT,), minval=-bound, maxval=bound,
                              dtype=jnp.float32)
    x = jax.random.normal(k1, (B, IN), dtype=jnp.float32)

    w_t, b_prepped = prepare_linear_params(w, bias, mxu_dtype=None)   # keep f32
    y = jax.block_until_ready(linear_forward(x, w_t, b_prepped, mxu_dtype=None))
    y_ref = x @ w.T + bias
    assert y.shape == (B, OUT)
    assert jnp.allclose(y, y_ref, atol=1e-5, rtol=1e-5), "small case mismatch"

    # ---- case 2: larger shapes exercising the tiled (2-D parallel) path -------
    B2, IN2, OUT2 = 256, 512, 384
    k1, k2, k3, key = jax.random.split(key, 4)
    bound2 = 1.0 / (IN2 ** 0.5)
    w2 = jax.random.uniform(k2, (OUT2, IN2), minval=-bound2, maxval=bound2,
                            dtype=jnp.float32)
    b2 = jax.random.uniform(k3, (OUT2,), minval=-bound2, maxval=bound2,
                            dtype=jnp.float32)
    x2 = jax.random.normal(k1, (B2, IN2), dtype=jnp.float32)

    w2_t, b2_prepped = prepare_linear_params(w2, b2)                  # bf16 MXU
    y2 = jax.block_until_ready(linear_forward(x2, w2_t, b2_prepped))
    y2_ref = x2 @ w2.T + b2
    assert y2.shape == (B2, OUT2)
    assert jnp.allclose(y2, y2_ref, atol=2e-2, rtol=2e-2), "tiled case mismatch"

    # ---- case 3: force the K-reduction (3-D grid) path -------------------------
    y3 = jax.block_until_ready(linear_forward(x2, w2_t, b2_prepped, tk=128))
    assert jnp.allclose(y3, y2_ref, atol=2e-2, rtol=2e-2), "k-grid case mismatch"

    print("KERNEL_OK")
</pallas_src>

<mosaic_0001>
module attributes {stable_mosaic.version = 11 : i64} {
  func.func @_linear_full_k_kernel(%arg0: memref<8x128xf32, #tpu.memory_space<vmem>>, %arg1: memref<128x128xf32, #tpu.memory_space<vmem>>, %arg2: memref<1x128xf32, #tpu.memory_space<vmem>>, %arg3: memref<8x128xf32, #tpu.memory_space<vmem>>) attributes {dimension_semantics = [], scalar_prefetch = 0 : i64, scratch_operands = 0 : i64, tpu.core_type = #tpu.core_type<tc>} {
    %c0 = arith.constant 0 : index
    %c0_0 = arith.constant 0 : index
    %0 = vector.load %arg0[%c0, %c0_0] : memref<8x128xf32, #tpu.memory_space<vmem>>, vector<8x128xf32>
    %c0_1 = arith.constant 0 : index
    %c0_2 = arith.constant 0 : index
    %1 = vector.load %arg1[%c0_1, %c0_2] : memref<128x128xf32, #tpu.memory_space<vmem>>, vector<128x128xf32>
    %cst = arith.constant dense<0.000000e+00> : vector<8x128xf32>
    %2 = tpu.matmul %0, %1, %cst {dimension_numbers = #tpu.dot_dimension_numbers<[1], [0], [0], [1], [0, 0, 1, 1], [], []>} : vector<8x128xf32>, vector<128x128xf32>, vector<8x128xf32> -> vector<8x128xf32>
    %c0_3 = arith.constant 0 : index
    %c0_4 = arith.constant 0 : index
    %3 = vector.load %arg2[%c0_3, %c0_4] : memref<1x128xf32, #tpu.memory_space<vmem>>, vector<1x128xf32>
    %4 = vector.broadcast %3 : vector<1x128xf32> to vector<8x128xf32>
    %5 = arith.addf %2, %4 : vector<8x128xf32>
    %c0_5 = arith.constant 0 : index
    %c0_6 = arith.constant 0 : index
    %6 = vector.load %arg3[%c0_5, %c0_6] : memref<8x128xf32, #tpu.memory_space<vmem>>, vector<8x128xf32>
    tpu.vector_store %arg3[%c0_5, %c0_6], %5 {strides = array<i32>} : memref<8x128xf32, #tpu.memory_space<vmem>>, vector<8x128xf32>,
    return
  }
}

</mosaic_0001>

<llo_original>
// kernel: tpu_custom_call.1
$region0: #{tpu_custom_call.1}
  #allocation0 [shape = 'u32[]', space=smem, size = 0x4, offset = 0x4, fixed_abs, tag = 'smem constant byte address 0x4 - core index']
  #allocation1 [shape = 'u32[72,128]{1,0:T(1,128)}', space=vmem, size = 0x9000, scoped, tag = 'internal scratch']
  %s0 = inlined_call_operand.hbm [shape: f32[8,128], index: 0, kind: input, shape index: {}]
  %s1 = inlined_call_operand.hbm [shape: f32[128,128], index: 1, kind: input, shape index: {}]
  %s2 = inlined_call_operand.vmem [shape: f32[1,128], index: 2, kind: input, shape index: {}]
  %s3 = inlined_call_operand.hbm [shape: f32[8,128], index: 3, kind: output, shape index: {}]
  %s4 = sld [smem:[#allocation0]]
  $region30: #{tpu_custom_call.1} parent=0
    _
  %s6 = ssub.s32 1, %s4
  %s7 = scalar_select 0, %s6, %s4
  $region1: #{tpu_custom_call.1} parent=0
    #allocation2 [shape = 'u8[4096]{0}', space=vmem, size = 0x1000, scoped, tag = 'input window, operand 0, single buffered']
    #allocation3 [shape = 's32[1]{0}', space=sflag, size = 0x4, scoped, tag = 'scoped memory for tpu_custom_call.1']
    #allocation4 [shape = 's32[1]{0}', space=sflag, size = 0x4, scoped, tag = 'scoped memory for tpu_custom_call.1']
    #allocation5 [shape = 'u8[65536]{0}', space=vmem, size = 0x10000, scoped, tag = 'input window, operand 1, single buffered']
    #allocation6 [shape = 's32[1]{0}', space=sflag, size = 0x4, scoped, tag = 'scoped memory for tpu_custom_call.1']
    #allocation7 [shape = 'u8[4096]{0}', space=vmem, size = 0x1000, scoped, tag = 'output window, operand 0, single buffered']
    %8 = vsyncpa [#allocation3], 0
    %9 = vsyncpa [#allocation6], 0
    %10 = vsyncpa [#allocation4], 0
    // Predicated region
    $region2: #{tpu_custom_call.1} parent=1 // pred_check
      _
    $region3: #{tpu_custom_call.1} parent=1 // pred_check_branch
      %12 = sbr.rel (0) target = $region5
    $region4: #{tpu_custom_call.1} parent=1 // pred_region
      %14 = vsyncadd [#allocation3], 0
      %s16 = sshll.u32 %s0, 4
      %s17 = int_to_ptr.hbm [resolvable:$true] %s16
      %s18 = sshll.u32 [#allocation2], 4
      %s19 = int_to_ptr.vmem [resolvable:$true] %s18
      %21 = dma.hbm_to_vmem [thread:$0]  %s17, 128, %s19, [#allocation3]
    $region5: #{tpu_custom_call.1} parent=1 // pred_fallthru
      _
    // Predicated region
    $region6: #{tpu_custom_call.1} parent=1 // pred_check
      _
    $region7: #{tpu_custom_call.1} parent=1 // pred_check_branch
      %23 = sbr.rel (0) target = $region9
    $region8: #{tpu_custom_call.1} parent=1 // pred_region
      %25 = vsyncadd [#allocation6], 0
      %s26 = sshll.u32 %s1, 4
      %s27 = int_to_ptr.hbm [resolvable:$true] %s26
      %s28 = sshll.u32 [#allocation5], 4
      %s29 = int_to_ptr.vmem [resolvable:$true] %s28
      %34 = dma.hbm_to_vmem [thread:$0]  %s27, 2048, %s29, [#allocation6], 128, 128, 8
    $region9: #{tpu_custom_call.1} parent=1 // pred_fallthru
      _
    // Predicated region
    $region10: #{tpu_custom_call.1} parent=1 // pred_check
      _
    $region11: #{tpu_custom_call.1} parent=1 // pred_check_branch
      %36 = sbr.rel (0) target = $region13
    $region12: #{tpu_custom_call.1} parent=1 // pred_region
      _
    $region13: #{tpu_custom_call.1} parent=1 // pred_fallthru
      _
    // Predicated region
    $region14: #{tpu_custom_call.1} parent=1 // pred_check
      _
    $region15: #{tpu_custom_call.1} parent=1 // pred_check_branch
      %38 = sbr.rel (0) target = $region17
    $region16: #{tpu_custom_call.1} parent=1 // pred_region
      %40 = dma.done [#allocation3], 128
    $region17: #{tpu_custom_call.1} parent=1 // pred_fallthru
      _
    // Predicated region
    $region18: #{tpu_custom_call.1} parent=1 // pred_check
      _
    $region19: #{tpu_custom_call.1} parent=1 // pred_check_branch
      %42 = sbr.rel (0) target = $region21
    $region20: #{tpu_custom_call.1} parent=1 // pred_region
      %44 = dma.done [#allocation6], 2048
    $region21: #{tpu_custom_call.1} parent=1 // pred_fallthru
      _
    %v45 = vld [vmem:[#allocation2] sm:$0xff]
    %v46 = vld [vmem:[#allocation5] sm:$0xff]
    %v47 = vld [vmem:[#allocation5 + $0x8] sm:$0xff]
    %v48 = vld [vmem:[#allocation5 + $0x10] sm:$0xff]
    %v49 = vld [vmem:[#allocation5 + $0x18] sm:$0xff]
    %v50 = vld [vmem:[#allocation5 + $0x20] sm:$0xff]
    %v51 = vld [vmem:[#allocation5 + $0x28] sm:$0xff]
    %v52 = vld [vmem:[#allocation5 + $0x30] sm:$0xff]
    %v53 = vld [vmem:[#allocation5 + $0x38] sm:$0xff]
    %v54 = vld [vmem:[#allocation5 + $0x40] sm:$0xff]
    %v55 = vld [vmem:[#allocation5 + $0x48] sm:$0xff]
    %v56 = vld [vmem:[#allocation5 + $0x50] sm:$0xff]
    %v57 = vld [vmem:[#allocation5 + $0x58] sm:$0xff]
    %v58 = vld [vmem:[#allocation5 + $0x60] sm:$0xff]
    %v59 = vld [vmem:[#allocation5 + $0x68] sm:$0xff]
    %v60 = vld [vmem:[#allocation5 + $0x70] sm:$0xff]
    %v61 = vld [vmem:[#allocation5 + $0x78] sm:$0xff]
    %v62 = vld [vmem:[%s2] sm:$0x1]
    %v64 = vperm.slane %v62, 0
    %66 = vmatpush.msra.mxu0 %v61
    %67 = vmatpush.msra.mxu0 %v60
    %68 = vmatpush.msra.mxu0 %v59
    %69 = vmatpush.msra.mxu0 %v58
    %70 = vmatpush.msra.mxu0 %v57
    %71 = vmatpush.msra.mxu0 %v56
    %72 = vmatpush.msra.mxu0 %v55
    %73 = vmatpush.msra.mxu0 %v54
    %74 = vmatpush.msra.mxu0 %v53
    %75 = vmatpush.msra.mxu0 %v52
    %76 = vmatpush.msra.mxu0 %v51
    %77 = vmatpush.msra.mxu0 %v50
    %78 = vmatpush.msra.mxu0 %v49
    %79 = vmatpush.msra.mxu0 %v48
    %80 = vmatpush.msra.mxu0 %v47
    %81 = vmatpush.msra.mxu0 %v46
    %82 = vmatmul.f32.gmra.mxu0 %v45
    %v83 = vpop.f32.mrf.mxu0
    %v84 = vadd.f32 %v64, %v83
    %85 = vdwg.mxu0
    %86 = vst [vmem:[#allocation7] sm:$0xff] %v84
    // Predicated region
    $region22: #{tpu_custom_call.1} parent=1 // pred_check
      _
    $region23: #{tpu_custom_call.1} parent=1 // pred_check_branch
      %88 = sbr.rel (0) target = $region25
    $region24: #{tpu_custom_call.1} parent=1 // pred_region
      %90 = vsyncadd [#allocation4], 0
      %s92 = sshll.u32 [#allocation7], 4
      %s93 = int_to_ptr.vmem [resolvable:$true] %s92
      %s94 = sshll.u32 %s3, 4
      %s95 = int_to_ptr.hbm [resolvable:$true] %s94
      %97 = dma.vmem_to_hbm [thread:$0]  %s93, 128, %s95, [#allocation4]
    $region25: #{tpu_custom_call.1} parent=1 // pred_fallthru
      _
    // Predicated region
    $region26: #{tpu_custom_call.1} parent=1 // pred_check
      _
    $region27: #{tpu_custom_call.1} parent=1 // pred_check_branch
      %99 = sbr.rel (0) target = $region29
    $region28: #{tpu_custom_call.1} parent=1 // pred_region
      %101 = dma.done [#allocation4], 128
    $region29: #{tpu_custom_call.1} parent=1 // pred_fallthru
      _
    %102 = vsyncpa [#allocation3], 1
    %103 = vsyncpa [#allocation6], 1
    %104 = vsyncpa [#allocation4], 1

</llo_original>
